<compile_context>
chip_gen: v6e
topology: v6e:2x2x1
jax: 0.10.0
libtpu: 0.0.40
codegen_flags: <defaults>
</compile_context>

<pallas_src>
import jax
import jax.numpy as jnp
from jax.experimental import pallas as pl
from jax.experimental.pallas import tpu as pltpu


# ----------------------------------------------------------------------------
# Host-side prep: exact position-weight map of (GAP o depthwise 3x3 conv)
# ----------------------------------------------------------------------------
def _dwconv_gap_position_weights(wk, h, w):
    """Position-weight map of zero-pad, stride-1, depthwise 3x3 conv + mean.

    wk : (C, 3, 3) depthwise weights, PyTorch cross-correlation layout
         (i.e. conv2d weight (C, 1, 3, 3) with the singleton squeezed).
    Returns posw (C, H*W) float32, with the 1/(H*W) of the average pool folded
    in, such that   mean_{i,j} dwconv(x)[b,c,i,j] == sum_p posw[c,p]*x[b,c,p].

    x[b,c,i,j] contributes through tap (ky,kx) iff the corresponding output
    position (i-(ky-1), j-(kx-1)) lies inside the image, so
        posw[c,i,j] = (1/HW) * sum_{valid (ky,kx)} wk[c,ky,kx].
    This is the inclusion-exclusion window-sum identity of the previous
    version, fully pre-reduced on the host (per-channel (C,9) coefficients
    folded into a spatial map).
    """
    c = wk.shape[0]
    iy = jnp.arange(h, dtype=jnp.int32)[:, None]      # (H, 1)
    jx = jnp.arange(w, dtype=jnp.int32)[None, :]      # (1, W)
    pos = jnp.zeros((c, h, w), jnp.float32)
    for ky in range(3):
        row_ok = (iy - (ky - 1) >= 0) & (iy - (ky - 1) <= h - 1)          # (H, 1)
        for kx in range(3):
            col_ok = (jx - (kx - 1) >= 0) & (jx - (kx - 1) <= w - 1)      # (1, W)
            m = (row_ok & col_ok).astype(jnp.float32)                     # (H, W)
            pos = pos + wk[:, ky, kx].astype(jnp.float32)[:, None, None] * m[None]
    return pos.reshape(c, h * w) * (1.0 / float(h * w))


# ----------------------------------------------------------------------------
# Pallas kernel: AdaptiveChannelSelection (whole batch, one grid step)
# ----------------------------------------------------------------------------
def _csm_kernel(x_ref, pwl_ref, pwh_ref, w1l_ref, w1h_ref, w2_ref, o_ref):
    # x_ref  : (B, C, HW)  activations; HW lane-dense, C in sublanes
    # pwl_ref: (C, HW)     Gaussian-branch position weights (1/HW folded in)
    # pwh_ref: (C, HW)     Laplace-branch position weights
    # w1l_ref: (C, HID)    fc1 columns for the Gaussian half, (in, out)
    # w1h_ref: (C, HID)    fc1 columns for the Laplace half,  (in, out)
    # w2_ref : (C, HID)    fc2 weight, (out, in)
    # o_ref  : (B, C, HW)
    x = x_ref[...]

    # Fused depthwise-conv + GAP: two weighted spatial sums.
    # (VPU multiply + XLU lane-reduce; channel axis stays in sublanes.)
    g_l = jnp.sum(x * pwl_ref[...][None], axis=-1, keepdims=True)        # (B, C, 1)
    g_h = jnp.sum(x * pwh_ref[...][None], axis=-1, keepdims=True)        # (B, C, 1)

    # FC gate, kept OFF the MXU: N=1 matvecs as broadcast-mul + reduce.
    hid = (jnp.sum(g_l * w1l_ref[...][None], axis=1, keepdims=True) +
           jnp.sum(g_h * w1h_ref[...][None], axis=1, keepdims=True))      # (B, 1, HID)
    hid = jnp.maximum(hid, 0.0)
    logits = jnp.sum(hid * w2_ref[...][None], axis=-1, keepdims=True)     # (B, C, 1)

    # Softmax over channels (sublane axis); exact division for parity.
    m = jnp.max(logits, axis=1, keepdims=True)
    e = jnp.exp(logits - m)
    gate = e / jnp.sum(e, axis=1, keepdims=True)                          # (B, C, 1)

    # Residual re-weight: x * cw + x == x * (cw + 1).
    o_ref[...] = x * (gate + 1.0)


@jax.jit
def adaptive_channel_selection(x_nchw, lap_w, gau_w, fc1_w, fc2_w):
    """AdaptiveChannelSelection.forward (NCHW, float32).

    lap_w, gau_w : (C, 3, 3) depthwise 3x3 weights (PyTorch layout, squeezed)
    fc1_w        : (HID, 2C) = nn.Linear(2C, HID, bias=False).weight
    fc2_w        : (C, HID)  = nn.Linear(HID, C, bias=False).weight
    """
    b, c, h, w = x_nchw.shape
    hw = h * w
    hid = fc1_w.shape[0]

    # NCHW is already channel-major: (B, C, H*W) is a free reshape and gives a
    # lane-dense H*W minor dim.  No pad / transpose of the activation tensor.
    x2 = x_nchw.reshape(b, c, hw).astype(jnp.float32)

    # Host-side prep (traced once under jit): exact conv+GAP position weights,
    # FC weights re-oriented so the channel axis lives in sublanes in-kernel.
    pw_l = _dwconv_gap_position_weights(gau_w, h, w)                 # (C, HW)
    pw_h = _dwconv_gap_position_weights(lap_w, h, w)                 # (C, HW)
    w1_l = jnp.transpose(fc1_w[:, :c]).astype(jnp.float32)           # (C, HID)
    w1_h = jnp.transpose(fc1_w[:, c:]).astype(jnp.float32)           # (C, HID)
    w2 = fc2_w.astype(jnp.float32)                                   # (C, HID)

    # Single grid step for the whole (small) batch: on single-TC v5e/v6e a
    # grid over batch is just sequential per-step overhead.  See header note
    # for the production-size two-phase tiling / v7x CORE_PARALLEL plan.
    out = pl.pallas_call(
        _csm_kernel,
        out_shape=jax.ShapeDtypeStruct((b, c, hw), jnp.float32),
        grid_spec=pltpu.PrefetchScalarGridSpec(
            num_scalar_prefetch=0,
            grid=(1,),
            in_specs=[
                pl.BlockSpec((b, c, hw), lambda i: (0, 0, 0)),
                pl.BlockSpec((c, hw), lambda i: (0, 0)),
                pl.BlockSpec((c, hw), lambda i: (0, 0)),
                pl.BlockSpec((c, hid), lambda i: (0, 0)),
                pl.BlockSpec((c, hid), lambda i: (0, 0)),
                pl.BlockSpec((c, hid), lambda i: (0, 0)),
            ],
            out_specs=pl.BlockSpec((b, c, hw), lambda i: (0, 0, 0)),
        ),
        input_output_aliases={0: 0},      # pure in-place re-weight of x
        compiler_params=pltpu.CompilerParams(
            dimension_semantics=("arbitrary",),
            vmem_limit_bytes=32 * 1024 * 1024,
        ),
    )(x2, pw_l, pw_h, w1_l, w1_h, w2)

    return out.reshape(b, c, h, w)


# ----------------------------------------------------------------------------
# Pure-JAX reference of CSM (for the runtime self-check only)
# ----------------------------------------------------------------------------
def csm_reference(x, lap_w, gau_w, fc1_w, fc2_w):
    b, c, h, w = x.shape

    def dwconv(inp, wk):
        return jax.lax.conv_general_dilated(
            inp, wk[:, None, :, :], window_strides=(1, 1),
            padding=((1, 1), (1, 1)),
            dimension_numbers=("NCHW", "OIHW", "NCHW"),
            feature_group_count=c)

    x_l = dwconv(x, gau_w)
    x_h = dwconv(x, lap_w)
    g = jnp.concatenate([x_l.mean(axis=(2, 3)), x_h.mean(axis=(2, 3))], axis=1)
    hid = jax.nn.relu(g @ fc1_w.T)
    gate = jax.nn.softmax(hid @ fc2_w.T, axis=-1)
    return x * gate[:, :, None, None] + x


# ----------------------------------------------------------------------------
# Stand-ins for modules whose definitions were not provided
# ----------------------------------------------------------------------------
def freq_mamba_standin(x, c_low):
    # TODO(synk): FreqMamba definition not provided; stand-in splits channels
    # into a low-frequency branch (dim//4) and a high-frequency branch (3*dim//4).
    return x[:, :c_low], x[:, c_low:]


def cross_mamba_standin(a, b, w_b2a):
    # TODO(synk): CrossMamba definition not provided; stand-in is a deterministic
    # 1x1 projection of b's channels onto a's channels (plain-JAX glue).
    return jnp.einsum('bchw,cd->bdhw', b, w_b2a)


def gaussian_kernel_2d(ksize=3, sigma=1.0):
    xs = jnp.arange(-(ksize // 2), ksize // 2 + 1, dtype=jnp.float32)
    g = jnp.exp(-xs ** 2 / (2.0 * sigma ** 2))
    k = g[:, None] * g[None, :]
    return k / jnp.sum(k)


# ----------------------------------------------------------------------------
# AFEM forward
# ----------------------------------------------------------------------------
def afem_forward(x, params):
    dim = x.shape[1]
    c_low = dim // 4

    lx, hx = freq_mamba_standin(x, c_low)                               # FreMamba
    hx = cross_mamba_standin(hx, lx, params['cmm1_w']) + hx             # CMM_1 + residual
    hx = adaptive_channel_selection(hx, params['lap_w'], params['gau_w'],
                                    params['fc1_w'], params['fc2_w'])   # CSM (Pallas)
    lx = cross_mamba_standin(lx, hx, params['cmm2_w']) + lx             # CMM_2 + residual
    return jnp.concatenate([lx, hx], axis=1)


# ----------------------------------------------------------------------------
if __name__ == "__main__":
    key = jax.random.PRNGKey(0)
    ks = jax.random.split(key, 8)

    # small shapes consistent with the module (dim divisible by 4)
    b, dim, h, w = 2, 32, 16, 16
    c_hi = dim // 4 * 3          # 24  (CSM operates on the high branch)
    c_lo = dim // 4              # 8
    ratio = 4
    hid = 2 * c_hi // ratio      # 12

    x = jax.random.normal(ks[0], (b, dim, h, w), jnp.float32)

    # Gaussian depthwise weights (matches _get_gaussian_kernel / _init_gaussian_weights)
    gk = gaussian_kernel_2d(3, 1.0)
    gau_w = jnp.broadcast_to(gk[None], (c_hi, 3, 3)).astype(jnp.float32)

    # TODO(synk): Laplace module definition not provided; fixed 3x3 Laplacian
    # depthwise kernel used as a deterministic stand-in.
    lap_k = jnp.array([[0., 1., 0.], [1., -4., 1.], [0., 1., 0.]], jnp.float32)
    lap_w = jnp.broadcast_to(lap_k[None], (c_hi, 3, 3)).astype(jnp.float32)

    params = dict(
        lap_w=lap_w,
        gau_w=gau_w,
        fc1_w=0.1 * jax.random.normal(ks[1], (2 * c_hi // ratio, 2 * c_hi), jnp.float32),
        fc2_w=0.1 * jax.random.normal(ks[2], (c_hi, 2 * c_hi // ratio), jnp.float32),
        cmm1_w=0.1 * jax.random.normal(ks[3], (c_lo, c_hi), jnp.float32),
        cmm2_w=0.1 * jax.random.normal(ks[4], (c_hi, c_lo), jnp.float32),
    )

    # --- self-check of the Pallas CSM against a pure-JAX reference, using
    #     ASYMMETRIC per-channel depthwise weights so a tap flip/transpose bug
    #     cannot hide behind kernel symmetry -------------------------------
    x_t = jax.random.normal(ks[5], (b, c_hi, h, w), jnp.float32)
    gau_t = gau_w + 0.05 * jax.random.normal(ks[6], (c_hi, 3, 3), jnp.float32)
    lap_t = lap_w + 0.05 * jax.random.normal(ks[7], (c_hi, 3, 3), jnp.float32)
    got = adaptive_channel_selection(x_t, lap_t, gau_t, params['fc1_w'], params['fc2_w'])
    want = csm_reference(x_t, lap_t, gau_t, params['fc1_w'], params['fc2_w'])
    got = jax.block_until_ready(got)
    assert jnp.allclose(got, want, rtol=5e-4, atol=5e-4), \
        float(jnp.max(jnp.abs(got - want)))

    # --- full AFEM forward ------------------------------------------------
    out = afem_forward(x, params)
    out = jax.block_until_ready(out)
    assert out.shape == (b, dim, h, w), out.shape
    assert jnp.all(jnp.isfinite(out))
    print("KERNEL_OK")
</pallas_src>

<mosaic_0001>
module attributes {stable_mosaic.version = 11 : i64} {
  func.func @_csm_kernel(%arg0: i32, %arg1: memref<2x24x256xf32, #tpu.memory_space<vmem>>, %arg2: memref<24x256xf32, #tpu.memory_space<vmem>>, %arg3: memref<24x256xf32, #tpu.memory_space<vmem>>, %arg4: memref<24x12xf32, #tpu.memory_space<vmem>>, %arg5: memref<24x12xf32, #tpu.memory_space<vmem>>, %arg6: memref<24x12xf32, #tpu.memory_space<vmem>>, %arg7: memref<2x24x256xf32, #tpu.memory_space<vmem>>) attributes {dimension_semantics = [#tpu.dimension_semantics<arbitrary>], iteration_bounds = array<i64: 1>, scalar_prefetch = 0 : i64, scratch_operands = 0 : i64, tpu.core_type = #tpu.core_type<tc>, window_params = [{pipeline_mode = #tpu.pipeline_mode<synchronous>, transform_indices = @transform_0, window_bounds = array<i64: 2, 24, 256>}, {pipeline_mode = #tpu.pipeline_mode<synchronous>, transform_indices = @transform_1, window_bounds = array<i64: 24, 256>}, {pipeline_mode = #tpu.pipeline_mode<synchronous>, transform_indices = @transform_2, window_bounds = array<i64: 24, 256>}, {pipeline_mode = #tpu.pipeline_mode<synchronous>, transform_indices = @transform_3, window_bounds = array<i64: 24, 12>}, {pipeline_mode = #tpu.pipeline_mode<synchronous>, transform_indices = @transform_4, window_bounds = array<i64: 24, 12>}, {pipeline_mode = #tpu.pipeline_mode<synchronous>, transform_indices = @transform_5, window_bounds = array<i64: 24, 12>}, {pipeline_mode = #tpu.pipeline_mode<synchronous>, transform_indices = @transform_6, window_bounds = array<i64: 2, 24, 256>}]} {
    %c0 = arith.constant 0 : index
    %c0_0 = arith.constant 0 : index
    %c0_1 = arith.constant 0 : index
    %0 = vector.load %arg1[%c0, %c0_0, %c0_1] : memref<2x24x256xf32, #tpu.memory_space<vmem>>, vector<2x24x256xf32>
    %c0_2 = arith.constant 0 : index
    %c0_3 = arith.constant 0 : index
    %1 = vector.load %arg2[%c0_2, %c0_3] : memref<24x256xf32, #tpu.memory_space<vmem>>, vector<24x256xf32>
    %2 = vector.shape_cast %1 : vector<24x256xf32> to vector<1x24x256xf32>
    %3 = vector.broadcast %2 : vector<1x24x256xf32> to vector<2x24x256xf32>
    %4 = arith.mulf %0, %3 : vector<2x24x256xf32>
    %cst = arith.constant dense<0.000000e+00> : vector<2x24xf32>
    %5 = vector.multi_reduction <add>, %4, %cst [2] : vector<2x24x256xf32> to vector<2x24xf32>
    %6 = vector.shape_cast %5 : vector<2x24xf32> to vector<2x24x1xf32>
    %c0_4 = arith.constant 0 : index
    %c0_5 = arith.constant 0 : index
    %7 = vector.load %arg3[%c0_4, %c0_5] : memref<24x256xf32, #tpu.memory_space<vmem>>, vector<24x256xf32>
    %8 = vector.shape_cast %7 : vector<24x256xf32> to vector<1x24x256xf32>
    %9 = vector.broadcast %8 : vector<1x24x256xf32> to vector<2x24x256xf32>
    %10 = arith.mulf %0, %9 : vector<2x24x256xf32>
    %cst_6 = arith.constant dense<0.000000e+00> : vector<2x24xf32>
    %11 = vector.multi_reduction <add>, %10, %cst_6 [2] : vector<2x24x256xf32> to vector<2x24xf32>
    %12 = vector.shape_cast %11 : vector<2x24xf32> to vector<2x24x1xf32>
    %c0_7 = arith.constant 0 : index
    %c0_8 = arith.constant 0 : index
    %13 = vector.load %arg4[%c0_7, %c0_8] : memref<24x12xf32, #tpu.memory_space<vmem>>, vector<24x12xf32>
    %14 = vector.shape_cast %13 : vector<24x12xf32> to vector<1x24x12xf32>
    %15 = vector.broadcast %6 : vector<2x24x1xf32> to vector<2x24x12xf32>
    %16 = vector.broadcast %14 : vector<1x24x12xf32> to vector<2x24x12xf32>
    %17 = arith.mulf %15, %16 : vector<2x24x12xf32>
    %cst_9 = arith.constant dense<0.000000e+00> : vector<2x12xf32>
    %18 = vector.multi_reduction <add>, %17, %cst_9 [1] : vector<2x24x12xf32> to vector<2x12xf32>
    %19 = vector.shape_cast %18 : vector<2x12xf32> to vector<2x1x12xf32>
    %c0_10 = arith.constant 0 : index
    %c0_11 = arith.constant 0 : index
    %20 = vector.load %arg5[%c0_10, %c0_11] : memref<24x12xf32, #tpu.memory_space<vmem>>, vector<24x12xf32>
    %21 = vector.shape_cast %20 : vector<24x12xf32> to vector<1x24x12xf32>
    %22 = vector.broadcast %12 : vector<2x24x1xf32> to vector<2x24x12xf32>
    %23 = vector.broadcast %21 : vector<1x24x12xf32> to vector<2x24x12xf32>
    %24 = arith.mulf %22, %23 : vector<2x24x12xf32>
    %cst_12 = arith.constant dense<0.000000e+00> : vector<2x12xf32>
    %25 = vector.multi_reduction <add>, %24, %cst_12 [1] : vector<2x24x12xf32> to vector<2x12xf32>
    %26 = vector.shape_cast %25 : vector<2x12xf32> to vector<2x1x12xf32>
    %27 = arith.addf %19, %26 : vector<2x1x12xf32>
    %cst_13 = arith.constant 0.000000e+00 : f32
    %28 = vector.broadcast %cst_13 : f32 to vector<2x1x12xf32>
    %29 = arith.maximumf %27, %28 : vector<2x1x12xf32>
    %c0_14 = arith.constant 0 : index
    %c0_15 = arith.constant 0 : index
    %30 = vector.load %arg6[%c0_14, %c0_15] : memref<24x12xf32, #tpu.memory_space<vmem>>, vector<24x12xf32>
    %31 = vector.shape_cast %30 : vector<24x12xf32> to vector<1x24x12xf32>
    %32 = vector.broadcast %29 : vector<2x1x12xf32> to vector<2x24x12xf32>
    %33 = vector.broadcast %31 : vector<1x24x12xf32> to vector<2x24x12xf32>
    %34 = arith.mulf %32, %33 : vector<2x24x12xf32>
    %cst_16 = arith.constant dense<0.000000e+00> : vector<2x24xf32>
    %35 = vector.multi_reduction <add>, %34, %cst_16 [2] : vector<2x24x12xf32> to vector<2x24xf32>
    %36 = vector.shape_cast %35 : vector<2x24xf32> to vector<2x24x1xf32>
    %cst_17 = arith.constant dense<0xFF800000> : vector<2x1xf32>
    %37 = vector.multi_reduction <maximumf>, %36, %cst_17 [1] : vector<2x24x1xf32> to vector<2x1xf32>
    %38 = vector.shape_cast %37 : vector<2x1xf32> to vector<2x1x1xf32>
    %39 = vector.broadcast %38 : vector<2x1x1xf32> to vector<2x24x1xf32>
    %40 = arith.subf %36, %39 : vector<2x24x1xf32>
    %41 = math.exp %40 : vector<2x24x1xf32>
    %cst_18 = arith.constant dense<0.000000e+00> : vector<2x1xf32>
    %42 = vector.multi_reduction <add>, %41, %cst_18 [1] : vector<2x24x1xf32> to vector<2x1xf32>
    %43 = vector.shape_cast %42 : vector<2x1xf32> to vector<2x1x1xf32>
    %44 = vector.broadcast %43 : vector<2x1x1xf32> to vector<2x24x1xf32>
    %45 = arith.divf %41, %44 : vector<2x24x1xf32>
    %cst_19 = arith.constant 1.000000e+00 : f32
    %46 = vector.broadcast %cst_19 : f32 to vector<2x24x1xf32>
    %47 = arith.addf %45, %46 : vector<2x24x1xf32>
    %48 = vector.broadcast %47 : vector<2x24x1xf32> to vector<2x24x256xf32>
    %49 = arith.mulf %0, %48 : vector<2x24x256xf32>
    %c0_20 = arith.constant 0 : index
    %c0_21 = arith.constant 0 : index
    %c0_22 = arith.constant 0 : index
    %50 = vector.load %arg7[%c0_20, %c0_21, %c0_22] : memref<2x24x256xf32, #tpu.memory_space<vmem>>, vector<2x24x256xf32>
    tpu.vector_store %arg7[%c0_20, %c0_21, %c0_22], %49 {strides = array<i32>} : memref<2x24x256xf32, #tpu.memory_space<vmem>>, vector<2x24x256xf32>,
    return
  }
  func.func @transform_0(%arg0: i32) -> (i32, i32, i32) {
    %c0_i32 = arith.constant 0 : i32
    %c0_i32_0 = arith.constant 0 : i32
    %c0_i32_1 = arith.constant 0 : i32
    %c0_i32_2 = arith.constant 0 : i32
    return %c0_i32, %c0_i32_0, %c0_i32_1 : i32, i32, i32
  }
  func.func @transform_1(%arg0: i32) -> (i32, i32) {
    %c0_i32 = arith.constant 0 : i32
    %c0_i32_0 = arith.constant 0 : i32
    %c0_i32_1 = arith.constant 0 : i32
    return %c0_i32, %c0_i32_0 : i32, i32
  }
  func.func @transform_2(%arg0: i32) -> (i32, i32) {
    %c0_i32 = arith.constant 0 : i32
    %c0_i32_0 = arith.constant 0 : i32
    %c0_i32_1 = arith.constant 0 : i32
    return %c0_i32, %c0_i32_0 : i32, i32
  }
  func.func @transform_3(%arg0: i32) -> (i32, i32) {
    %c0_i32 = arith.constant 0 : i32
    %c0_i32_0 = arith.constant 0 : i32
    %c0_i32_1 = arith.constant 0 : i32
    return %c0_i32, %c0_i32_0 : i32, i32
  }
  func.func @transform_4(%arg0: i32) -> (i32, i32) {
    %c0_i32 = arith.constant 0 : i32
    %c0_i32_0 = arith.constant 0 : i32
    %c0_i32_1 = arith.constant 0 : i32
    return %c0_i32, %c0_i32_0 : i32, i32
  }
  func.func @transform_5(%arg0: i32) -> (i32, i32) {
    %c0_i32 = arith.constant 0 : i32
    %c0_i32_0 = arith.constant 0 : i32
    %c0_i32_1 = arith.constant 0 : i32
    return %c0_i32, %c0_i32_0 : i32, i32
  }
  func.func @transform_6(%arg0: i32) -> (i32, i32, i32) {
    %c0_i32 = arith.constant 0 : i32
    %c0_i32_0 = arith.constant 0 : i32
    %c0_i32_1 = arith.constant 0 : i32
    %c0_i32_2 = arith.constant 0 : i32
    return %c0_i32, %c0_i32_0, %c0_i32_1 : i32, i32, i32
  }
}

</mosaic_0001>

<llo_original>
// kernel: adaptive_channel_selection.1
$region0: #{adaptive_channel_selection.1}
  #allocation0 [shape = 'u32[]', space=smem, size = 0x4, offset = 0x4, fixed_abs, tag = 'smem constant byte address 0x4 - core index']
  #allocation1 [shape = 'u32[144,128]{1,0:T(1,128)}', space=vmem, size = 0x12000, scoped, tag = 'internal scratch']
  %s0 = inlined_call_operand.vmem [shape: f32[2,24,256], index: 0, kind: input, shape index: {}, may-alias: {0,6}]
  %s1 = inlined_call_operand.vmem [shape: f32[24,256], index: 1, kind: input, shape index: {}]
  %s2 = inlined_call_operand.vmem [shape: f32[24,256], index: 2, kind: input, shape index: {}]
  %s3 = inlined_call_operand.vmem [shape: f32[24,12], index: 3, kind: input, shape index: {}]
  %s4 = inlined_call_operand.vmem [shape: f32[24,12], index: 4, kind: input, shape index: {}]
  %s5 = inlined_call_operand.vmem [shape: f32[24,12], index: 5, kind: input, shape index: {}]
  %s6 = inlined_call_operand.vmem [shape: f32[2,24,256], index: 6, kind: output, shape index: {}, may-alias: {0,6}]
  %s7 = sld [smem:[#allocation0]]
  $region34: #{adaptive_channel_selection.1} parent=0
    _
  %s9 = ssub.s32 1, %s7
  %s10 = scalar_select 0, %s9, %s7
  // Predicated region
  $region2: #{adaptive_channel_selection.1} parent=0 // pred_check
    _
  $region3: #{adaptive_channel_selection.1} parent=0 // pred_check_branch
    %12 = sbr.rel (0) target = $region5
  $region4: #{adaptive_channel_selection.1} parent=0 // pred_region
    _
  $region5: #{adaptive_channel_selection.1} parent=0 // pred_fallthru
    _
  // Predicated region
  $region6: #{adaptive_channel_selection.1} parent=0 // pred_check
    _
  $region7: #{adaptive_channel_selection.1} parent=0 // pred_check_branch
    %14 = sbr.rel (0) target = $region9
  $region8: #{adaptive_channel_selection.1} parent=0 // pred_region
    _
  $region9: #{adaptive_channel_selection.1} parent=0 // pred_fallthru
    _
  // Predicated region
  $region10: #{adaptive_channel_selection.1} parent=0 // pred_check
    _
  $region11: #{adaptive_channel_selection.1} parent=0 // pred_check_branch
    %16 = sbr.rel (0) target = $region13
  $region12: #{adaptive_channel_selection.1} parent=0 // pred_region
    _
  $region13: #{adaptive_channel_selection.1} parent=0 // pred_fallthru
    _
  // Predicated region
  $region14: #{adaptive_channel_selection.1} parent=0 // pred_check
    _
  $region15: #{adaptive_channel_selection.1} parent=0 // pred_check_branch
    %18 = sbr.rel (0) target = $region17
  $region16: #{adaptive_channel_selection.1} parent=0 // pred_region
    _
  $region17: #{adaptive_channel_selection.1} parent=0 // pred_fallthru
    _
  // Predicated region
  $region18: #{adaptive_channel_selection.1} parent=0 // pred_check
    _
  $region19: #{adaptive_channel_selection.1} parent=0 // pred_check_branch
    %20 = sbr.rel (0) target = $region21
  $region20: #{adaptive_channel_selection.1} parent=0 // pred_region
    _
  $region21: #{adaptive_channel_selection.1} parent=0 // pred_fallthru
    _
  // Predicated region
  $region22: #{adaptive_channel_selection.1} parent=0 // pred_check
    _
  $region23: #{adaptive_channel_selection.1} parent=0 // pred_check_branch
    %22 = sbr.rel (0) target = $region25
  $region24: #{adaptive_channel_selection.1} parent=0 // pred_region
    _
  $region25: #{adaptive_channel_selection.1} parent=0 // pred_fallthru
    _
  %v23 = vld [vmem:[%s0] sm:$0xff]
  %v24 = vld [vmem:[%s0 + $0x8] sm:$0xff]
  %v25 = vld [vmem:[%s0 + $0x10] sm:$0xff]
  %v26 = vld [vmem:[%s0 + $0x18] sm:$0xff]
  %v27 = vld [vmem:[%s0 + $0x20] sm:$0xff]
  %v28 = vld [vmem:[%s0 + $0x28] sm:$0xff]
  %v29 = vld [vmem:[%s0 + $0x30] sm:$0xff]
  %v30 = vld [vmem:[%s0 + $0x38] sm:$0xff]
  %v31 = vld [vmem:[%s0 + $0x40] sm:$0xff]
  %v32 = vld [vmem:[%s0 + $0x48] sm:$0xff]
  %v33 = vld [vmem:[%s0 + $0x50] sm:$0xff]
  %v34 = vld [vmem:[%s0 + $0x58] sm:$0xff]
  %v35 = vld [vmem:[%s1] sm:$0xff]
  %v36 = vld [vmem:[%s1 + $0x8] sm:$0xff]
  %v37 = vld [vmem:[%s1 + $0x10] sm:$0xff]
  %v38 = vld [vmem:[%s1 + $0x18] sm:$0xff]
  %v39 = vld [vmem:[%s1 + $0x20] sm:$0xff]
  %v40 = vld [vmem:[%s1 + $0x28] sm:$0xff]
  %v41 = vmul.f32 %v23, %v35
  %v42 = vmul.f32 %v24, %v36
  %v43 = vmul.f32 %v25, %v37
  %v44 = vmul.f32 %v26, %v38
  %v45 = vmul.f32 %v27, %v39
  %v46 = vmul.f32 %v28, %v40
  %v47 = vmul.f32 %v29, %v35
  %v48 = vmul.f32 %v30, %v36
  %v49 = vmul.f32 %v31, %v37
  %v50 = vmul.f32 %v32, %v38
  %v51 = vmul.f32 %v33, %v39
  %v52 = vmul.f32 %v34, %v40
  %v53 = vadd.f32 %v41, %v42
  %54 = vadd.xlane.f32.xlu0 %v53
  %v55 = vpop.xlane.xlu0 %54
  %v56 = vadd.f32 %v43, %v44
  %57 = vadd.xlane.f32.xlu0 %v56
  %v58 = vpop.xlane.xlu0 %57
  %v59 = vadd.f32 %v45, %v46
  %60 = vadd.xlane.f32.xlu0 %v59
  %v61 = vpop.xlane.xlu0 %60
  %v62 = vadd.f32 %v47, %v48
  %63 = vadd.xlane.f32.xlu0 %v62
  %v64 = vpop.xlane.xlu0 %63
  %v65 = vadd.f32 %v49, %v50
  %66 = vadd.xlane.f32.xlu0 %v65
  %v67 = vpop.xlane.xlu0 %66
  %v68 = vadd.f32 %v51, %v52
  %69 = vadd.xlane.f32.xlu0 %v68
  %v70 = vpop.xlane.xlu0 %69
  %v71 = vld [vmem:[%s2] sm:$0xff]
  %v72 = vld [vmem:[%s2 + $0x8] sm:$0xff]
  %v73 = vld [vmem:[%s2 + $0x10] sm:$0xff]
  %v74 = vld [vmem:[%s2 + $0x18] sm:$0xff]
  %v75 = vld [vmem:[%s2 + $0x20] sm:$0xff]
  %v76 = vld [vmem:[%s2 + $0x28] sm:$0xff]
  %v77 = vmul.f32 %v23, %v71
  %v78 = vmul.f32 %v24, %v72
  %v79 = vmul.f32 %v25, %v73
  %v80 = vmul.f32 %v26, %v74
  %v81 = vmul.f32 %v27, %v75
  %v82 = vmul.f32 %v28, %v76
  %v83 = vmul.f32 %v29, %v71
  %v84 = vmul.f32 %v30, %v72
  %v85 = vmul.f32 %v31, %v73
  %v86 = vmul.f32 %v32, %v74
  %v87 = vmul.f32 %v33, %v75
  %v88 = vmul.f32 %v34, %v76
  %v89 = vadd.f32 %v77, %v78
  %90 = vadd.xlane.f32.xlu0 %v89
  %v91 = vpop.xlane.xlu0 %90
  %v92 = vadd.f32 %v79, %v80
  %93 = vadd.xlane.f32.xlu0 %v92
  %v94 = vpop.xlane.xlu0 %93
  %v95 = vadd.f32 %v81, %v82
  %96 = vadd.xlane.f32.xlu0 %v95
  %v97 = vpop.xlane.xlu0 %96
  %v98 = vadd.f32 %v83, %v84
  %99 = vadd.xlane.f32.xlu0 %v98
  %v100 = vpop.xlane.xlu0 %99
  %v101 = vadd.f32 %v85, %v86
  %102 = vadd.xlane.f32.xlu0 %v101
  %v103 = vpop.xlane.xlu0 %102
  %v104 = vadd.f32 %v87, %v88
  %105 = vadd.xlane.f32.xlu0 %v104
  %v106 = vpop.xlane.xlu0 %105
  %v107 = vld [vmem:[%s3] sm:$0xff]
  %v108 = vld [vmem:[%s3 + $0x8] sm:$0xff]
  %v109 = vld [vmem:[%s3 + $0x10] sm:$0xff]
  %v110 = vmul.f32 %v55, %v107
  %v111 = vmul.f32 %v58, %v108
  %v112 = vmul.f32 %v61, %v109
  %v113 = vmul.f32 %v64, %v107
  %v114 = vmul.f32 %v67, %v108
  %v115 = vmul.f32 %v70, %v109
  %vm116 = vcmask 97280
  %v117 = vsel %vm116, %v110, 0.0
  %v118 = vsel %vm116, %v111, 0.0
  %v119 = vadd.f32 %v117, %v118
  %v120 = vsel %vm116, %v112, 0.0
  %v121 = vadd.f32 %v119, %v120
  %v122 = vrot.slane %v121, 4
  %v123 = vadd.f32 %v121, %v122
  %v124 = vrot.slane %v123, 2
  %v125 = vadd.f32 %v123, %v124
  %v126 = vrot.slane %v125, 1
  %v127 = vadd.f32 %v125, %v126
  %v128 = vsel %vm116, %v113, 0.0
  %v129 = vsel %vm116, %v114, 0.0
  %v130 = vadd.f32 %v128, %v129
  %v131 = vsel %vm116, %v115, 0.0
  %v132 = vadd.f32 %v130, %v131
  %v133 = vrot.slane %v132, 4
  %v134 = vadd.f32 %v132, %v133
  %v135 = vrot.slane %v134, 2
  %v136 = vadd.f32 %v134, %v135
  %v137 = vrot.slane %v136, 1
  %v138 = vadd.f32 %v136, %v137
  %v139 = vld [vmem:[%s4] sm:$0xff]
  %v140 = vld [vmem:[%s4 + $0x8] sm:$0xff]
  %v141 = vld [vmem:[%s4 + $0x10] sm:$0xff]
  %v142 = vmul.f32 %v91, %v139
  %v143 = vmul.f32 %v94, %v140
  %v144 = vmul.f32 %v97, %v141
  %v145 = vmul.f32 %v100, %v139
  %v146 = vmul.f32 %v103, %v140
  %v147 = vmul.f32 %v106, %v141
  %v148 = vsel %vm116, %v142, 0.0
  %v149 = vsel %vm116, %v143, 0.0
  %v150 = vadd.f32 %v148, %v149
  %v151 = vsel %vm116, %v144, 0.0
  %v152 = vadd.f32 %v150, %v151
  %v153 = vrot.slane %v152, 4
  %v154 = vadd.f32 %v152, %v153
  %v155 = vrot.slane %v154, 2
  %v156 = vadd.f32 %v154, %v155
  %v157 = vrot.slane %v156, 1
  %v158 = vadd.f32 %v156, %v157
  %v159 = vsel %vm116, %v145, 0.0
  %v160 = vsel %vm116, %v146, 0.0
  %v161 = vadd.f32 %v159, %v160
  %v162 = vsel %vm116, %v147, 0.0
  %v163 = vadd.f32 %v161, %v162
  %v164 = vrot.slane %v163, 4
  %v165 = vadd.f32 %v163, %v164
  %v166 = vrot.slane %v165, 2
  %v167 = vadd.f32 %v165, %v166
  %v168 = vrot.slane %v167, 1
  %v169 = vadd.f32 %v167, %v168
  %v170 = vadd.f32 %v127, %v158
  %v171 = vadd.f32 %v138, %v169
  %v172 = vmax.f32 %v170, 0.0
  %v173 = vmax.f32 %v171, 0.0
  %v174 = vld [vmem:[%s5] sm:$0xff]
  %v175 = vld [vmem:[%s5 + $0x8] sm:$0xff]
  %v176 = vld [vmem:[%s5 + $0x10] sm:$0xff]
  %v177 = vmul.f32 %v172, %v174
  %v178 = vmul.f32 %v172, %v175
  %v179 = vmul.f32 %v172, %v176
  %v180 = vmul.f32 %v173, %v174
  %v181 = vmul.f32 %v173, %v175
  %v182 = vmul.f32 %v173, %v176
  %v183 = vsel %vm116, %v177, 0.0
  %184 = vadd.xlane.f32.xlu0 %v183
  %v185 = vpop.xlane.xlu0 %184
  %v186 = vsel %vm116, %v178, 0.0
  %187 = vadd.xlane.f32.xlu0 %v186
  %v188 = vpop.xlane.xlu0 %187
  %v189 = vsel %vm116, %v179, 0.0
  %190 = vadd.xlane.f32.xlu0 %v189
  %v191 = vpop.xlane.xlu0 %190
  %v192 = vsel %vm116, %v180, 0.0
  %193 = vadd.xlane.f32.xlu0 %v192
  %v194 = vpop.xlane.xlu0 %193
  %v195 = vsel %vm116, %v181, 0.0
  %196 = vadd.xlane.f32.xlu0 %v195
  %v197 = vpop.xlane.xlu0 %196
  %v198 = vsel %vm116, %v182, 0.0
  %199 = vadd.xlane.f32.xlu0 %v198
  %v200 = vpop.xlane.xlu0 %199
  %v201 = vmax.f32 %v185, %v191
  %v202 = vmax.f32 %v201, %v188
  %v203 = vrot.slane %v202, 4
  %v204 = vmax.f32 %v202, %v203
  %v205 = vrot.slane %v204, 2
  %v206 = vmax.f32 %v204, %v205
  %v207 = vrot.slane %v206, 1
  %v208 = vmax.f32 %v206, %v207
  %v209 = vmax.f32 %v194, %v200
  %v210 = vmax.f32 %v209, %v197
  %v211 = vrot.slane %v210, 4
  %v212 = vmax.f32 %v210, %v211
  %v213 = vrot.slane %v212, 2
  %v214 = vmax.f32 %v212, %v213
  %v215 = vrot.slane %v214, 1
  %v216 = vmax.f32 %v214, %v215
  %v217 = vsub.f32 %v185, %v208
  %v218 = vsub.f32 %v188, %v208
  %v219 = vsub.f32 %v191, %v208
  %v220 = vsub.f32 %v194, %v216
  %v221 = vsub.f32 %v197, %v216
  %v222 = vsub.f32 %v200, %v216
  %v223 = vmul.f32 %v217, 1.442695
  %v224 = vpow.pop %v223
  %v225 = vmul.f32 %v218, 1.442695
  %v226 = vpow.pop %v225
  %v227 = vmul.f32 %v219, 1.442695
  %v228 = vpow.pop %v227
  %v229 = vmul.f32 %v220, 1.442695
  %v230 = vpow.pop %v229
  %v231 = vmul.f32 %v221, 1.442695
  %v232 = vpow.pop %v231
  %v233 = vmul.f32 %v222, 1.442695
  %v234 = vpow.pop %v233
  %v235 = vadd.f32 %v224, %v226
  %v236 = vadd.f32 %v235, %v228
  %v237 = vrot.slane %v236, 4
  %v238 = vadd.f32 %v236, %v237
  %v239 = vrot.slane %v238, 2
  %v240 = vadd.f32 %v238, %v239
  %v241 = vrot.slane %v240, 1
  %v242 = vadd.f32 %v240, %v241
  %v243 = vadd.f32 %v230, %v232
  %v244 = vadd.f32 %v243, %v234
  %v245 = vrot.slane %v244, 4
  %v246 = vadd.f32 %v244, %v245
  %v247 = vrot.slane %v246, 2
  %v248 = vadd.f32 %v246, %v247
  %v249 = vrot.slane %v248, 1
  %v250 = vadd.f32 %v248, %v249
  %v251 = vrcp.pop %v242
  %v252 = vmul.f32 %v224, %v251
  %v253 = vmul.f32 %v226, %v251
  %v254 = vmul.f32 %v228, %v251
  %v255 = vrcp.pop %v250
  %v256 = vmul.f32 %v230, %v255
  %v257 = vmul.f32 %v232, %v255
  %v258 = vmul.f32 %v234, %v255
  %v259 = vadd.f32 %v252, 1.0
  %v260 = vadd.f32 %v253, 1.0
  %v261 = vadd.f32 %v254, 1.0
  %v262 = vadd.f32 %v256, 1.0
  %v263 = vadd.f32 %v257, 1.0
  %v264 = vadd.f32 %v258, 1.0
  %v265 = vmul.f32 %v23, %v259
  %v266 = vmul.f32 %v24, %v259
  %v267 = vmul.f32 %v25, %v260
  %v268 = vmul.f32 %v26, %v260
  %v269 = vmul.f32 %v27, %v261
  %v270 = vmul.f32 %v28, %v261
  %v271 = vmul.f32 %v29, %v262
  %v272 = vmul.f32 %v30, %v262
  %v273 = vmul.f32 %v31, %v263
  %v274 = vmul.f32 %v32, %v263
  %v275 = vmul.f32 %v33, %v264
  %v276 = vmul.f32 %v34, %v264
  %277 = vst [vmem:[%s6] sm:$0xff] %v265
  %278 = vst [vmem:[%s6 + $0x8] sm:$0xff] %v266
  %279 = vst [vmem:[%s6 + $0x10] sm:$0xff] %v267
  %280 = vst [vmem:[%s6 + $0x18] sm:$0xff] %v268
  %281 = vst [vmem:[%s6 + $0x20] sm:$0xff] %v269
  %282 = vst [vmem:[%s6 + $0x28] sm:$0xff] %v270
  %283 = vst [vmem:[%s6 + $0x30] sm:$0xff] %v271
  %284 = vst [vmem:[%s6 + $0x38] sm:$0xff] %v272
  %285 = vst [vmem:[%s6 + $0x40] sm:$0xff] %v273
  %286 = vst [vmem:[%s6 + $0x48] sm:$0xff] %v274
  %287 = vst [vmem:[%s6 + $0x50] sm:$0xff] %v275
  %288 = vst [vmem:[%s6 + $0x58] sm:$0xff] %v276
  // Predicated region
  $region26: #{adaptive_channel_selection.1} parent=0 // pred_check
    _
  $region27: #{adaptive_channel_selection.1} parent=0 // pred_check_branch
    %290 = sbr.rel (0) target = $region29
  $region28: #{adaptive_channel_selection.1} parent=0 // pred_region
    _
  $region29: #{adaptive_channel_selection.1} parent=0 // pred_fallthru
    _
  // Predicated region
  $region30: #{adaptive_channel_selection.1} parent=0 // pred_check
    _
  $region31: #{adaptive_channel_selection.1} parent=0 // pred_check_branch
    %292 = sbr.rel (0) target = $region33
  $region32: #{adaptive_channel_selection.1} parent=0 // pred_region
    _
  $region33: #{adaptive_channel_selection.1} parent=0 // pred_fallthru
    _

</llo_original>
